<compile_context>
chip_gen: v5e
topology: v5e:2x2
jax: 0.10.0
libtpu: 0.0.40
codegen_flags: <defaults>
</compile_context>

<pallas_src>
import functools

import jax
import jax.numpy as jnp
from jax.experimental import pallas as pl
from jax.experimental.pallas import tpu as pltpu

EPS = 1e-8
_FALLBACK_VMEM_BYTES = 64 * 1024 * 1024     # conservative default (v7x per-TC)


# --------------------------------------------------------------------------
# VMEM budgets / tile sizing
# --------------------------------------------------------------------------
@functools.lru_cache(maxsize=None)
def _physical_vmem_bytes():
    try:
        info = pltpu.get_tpu_info()
        v = getattr(info, "vmem_capacity_bytes", None)
        if v:
            return int(v)
    except Exception:
        pass
    return _FALLBACK_VMEM_BYTES


def _budgets():
    phys = _physical_vmem_bytes()
    vmem_limit = (3 * phys) // 4      # explicit scoped-VMEM limit (headroom left)
    tile_budget = phys // 4           # per-pass pipeline footprint target
    return vmem_limit, tile_budget


def _round_tile(cols, T):
    """Largest lane-dense (multiple-of-128) tile <= cols, or the full T."""
    if cols >= T:
        return T
    return max(128, (cols // 128) * 128)


def _stats_time_tile(C, T, itemsize, tile_budget):
    # input double-buffered (native dtype) + ~2 f32 working copies per element
    bytes_per_col = C * (2 * itemsize + 8)
    return _round_tile(tile_budget // bytes_per_col, T)


def _norm_time_tile(C, T, itemsize, tile_budget):
    # input + output double-buffered (native dtype) + ~1 f32 working copy
    bytes_per_col = C * (4 * itemsize + 4)
    return _round_tile(tile_budget // bytes_per_col, T)


def _fused_fits(C, T, itemsize, vmem_limit):
    slab_native = C * T * itemsize
    slab_f32 = C * T * 4
    # in/out double-buffered across the batch grid + ~3 f32 working slabs
    return 4 * slab_native + 3 * slab_f32 <= vmem_limit


# --------------------------------------------------------------------------
# Fused single-pass kernel (stats + normalize + PReLU on a resident slab)
# --------------------------------------------------------------------------
def _fused_kernel(x_ref, gamma_ref, beta_ref, alpha_ref, o_ref):
    x = x_ref[...].astype(jnp.float32)                    # (C, T), resident
    inv_n = 1.0 / float(x.size)
    mean = jnp.sum(x) * inv_n
    centered = x - mean
    var = jnp.sum(centered * centered) * inv_n            # exact two-pass variance
    rstd = jax.lax.rsqrt(var + EPS)
    scale = gamma_ref[...] * rstd                         # (C, 1)
    y = centered * scale + beta_ref[...]
    alpha = alpha_ref[0]                                  # shared PReLU slope (SMEM)
    o_ref[...] = jnp.where(y >= 0, y, alpha * y).astype(o_ref.dtype)


# --------------------------------------------------------------------------
# Tiled fallback: pass 1 (stats) and pass 2 (normalize + PReLU)
# --------------------------------------------------------------------------
def _make_stats_kernel(nT, nTs, rem):
    """Per-channel sum / sum-of-squares accumulation over time tiles."""

    def stats_kernel(x_ref, sum_ref, sumsq_ref):
        s = pl.program_id(1)
        t = pl.program_id(2)

        @pl.when(t == 0)
        def _():
            sum_ref[...] = jnp.zeros_like(sum_ref)
            sumsq_ref[...] = jnp.zeros_like(sumsq_ref)

        def accumulate(x):
            # Per-channel (C, 1) partials: shorter accumulation chains than a
            # single scalar, and only a tiny reduce in the glue.
            sum_ref[...] += jnp.sum(x, axis=-1, keepdims=True)
            sumsq_ref[...] += jnp.sum(x * x, axis=-1, keepdims=True)

        if rem == 0:
            accumulate(x_ref[...].astype(jnp.float32))
        else:
            # Ragged tail: mask only on the last global time tile.
            is_last = (s * nTs + t) == (nT - 1)

            @pl.when(jnp.logical_not(is_last))
            def _():
                accumulate(x_ref[...].astype(jnp.float32))

            @pl.when(is_last)
            def _():
                x = x_ref[...].astype(jnp.float32)        # (C, tT)
                col = jax.lax.broadcasted_iota(jnp.int32, x.shape, 1)
                accumulate(jnp.where(col < rem, x, 0.0))

    return stats_kernel


def _normalize_kernel(x_ref, scale_ref, shift_ref, alpha_ref, o_ref):
    x = x_ref[...].astype(jnp.float32)                    # (C, tT)
    # Fused affine: (x - mean) * rstd * gamma + beta  ==  x*scale + shift
    y = x * scale_ref[...] + shift_ref[...]
    alpha = alpha_ref[0]
    o_ref[...] = jnp.where(y >= 0, y, alpha * y).astype(o_ref.dtype)


# --------------------------------------------------------------------------
# Wrapper
# --------------------------------------------------------------------------
@functools.partial(jax.jit, static_argnames=("time_tile",))
def norm_act(x, gamma, beta, alpha, *, time_tile=None):
    """NormAct forward: GlobLN over (C, T) per batch, then PReLU.

    x: (B, C, T); gamma, beta: (C,); alpha: scalar (shared PReLU slope).
    `time_tile` (optional, static) forces the tiled two-pass path.
    """
    B, C, T = x.shape
    itemsize = x.dtype.itemsize
    vmem_limit, tile_budget = _budgets()

    gamma_f = gamma.astype(jnp.float32).reshape(C, 1)
    beta_f = beta.astype(jnp.float32).reshape(C, 1)
    alpha1 = jnp.asarray(alpha, jnp.float32).reshape(1)

    # ---- Fused single-pass path: one HBM read + one write of x --------------
    if time_tile is None and _fused_fits(C, T, itemsize, vmem_limit):
        return pl.pallas_call(
            _fused_kernel,
            out_shape=jax.ShapeDtypeStruct((B, C, T), x.dtype),
            grid_spec=pltpu.PrefetchScalarGridSpec(
                num_scalar_prefetch=0,
                grid=(B,),
                in_specs=[
                    pl.BlockSpec((None, C, T), lambda b: (b, 0, 0)),
                    pl.BlockSpec((C, 1), lambda b: (0, 0)),
                    pl.BlockSpec((C, 1), lambda b: (0, 0)),
                    pl.BlockSpec(memory_space=pltpu.MemorySpace.SMEM),
                ],
                out_specs=pl.BlockSpec((None, C, T), lambda b: (b, 0, 0)),
            ),
            compiler_params=pltpu.CompilerParams(
                dimension_semantics=("parallel",),
                vmem_limit_bytes=vmem_limit,
            ),
        )(x, gamma_f, beta_f, alpha1)

    # ---- Tiled fallback ------------------------------------------------------
    # Pass 1: per-batch, per-channel sum / sum-of-squares.
    if time_tile is not None:
        tT = _round_tile(int(time_tile), T)      # validate/round user tile
    else:
        tT = _stats_time_tile(C, T, itemsize, tile_budget)
    nT = pl.cdiv(T, tT)
    rem = T % tT
    # Split the time reduction in two so both v7x TensorCores work at small B.
    nSplit = 2 if (nT >= 2 and nT % 2 == 0) else 1
    nTs = nT // nSplit

    sums, sumsqs = pl.pallas_call(
        _make_stats_kernel(nT, nTs, rem),
        out_shape=(
            jax.ShapeDtypeStruct((B, nSplit, C, 1), jnp.float32),
            jax.ShapeDtypeStruct((B, nSplit, C, 1), jnp.float32),
        ),
        grid_spec=pltpu.PrefetchScalarGridSpec(
            num_scalar_prefetch=0,
            grid=(B, nSplit, nTs),
            in_specs=[
                pl.BlockSpec((None, C, tT), lambda b, s, t: (b, 0, s * nTs + t))
            ],
            out_specs=(
                pl.BlockSpec((None, None, C, 1), lambda b, s, t: (b, s, 0, 0)),
                pl.BlockSpec((None, None, C, 1), lambda b, s, t: (b, s, 0, 0)),
            ),
        ),
        compiler_params=pltpu.CompilerParams(
            dimension_semantics=("parallel", "parallel", "arbitrary"),
            vmem_limit_bytes=vmem_limit,
        ),
    )(x)

    # Glue (tiny, plain JAX): fold stats + gamma/beta into scale/shift.
    # Note: this fallback uses single-pass variance (E[x^2] - mean^2); the
    # per-channel f32 partials keep round-off small, and the (default) fused
    # path uses an exact two-pass variance.
    n = float(C * T)
    total = jnp.sum(sums, axis=(1, 2, 3))                       # (B,)
    total_sq = jnp.sum(sumsqs, axis=(1, 2, 3))                  # (B,)
    mean = total / n
    var = jnp.maximum(total_sq / n - mean * mean, 0.0)
    rstd = jax.lax.rsqrt(var + EPS)
    scale = gamma_f[None, :, 0] * rstd[:, None]                 # (B, C)
    shift = beta_f[None, :, 0] - mean[:, None] * scale          # (B, C)
    scale3 = scale[:, :, None]                                  # (B, C, 1)
    shift3 = shift[:, :, None]

    # Pass 2: fully parallel normalize + affine + PReLU.
    if time_tile is not None:
        tT2 = tT
    else:
        tT2 = _norm_time_tile(C, T, itemsize, tile_budget)
    nT2 = pl.cdiv(T, tT2)

    return pl.pallas_call(
        _normalize_kernel,
        out_shape=jax.ShapeDtypeStruct((B, C, T), x.dtype),
        grid_spec=pltpu.PrefetchScalarGridSpec(
            num_scalar_prefetch=0,
            grid=(B, nT2),
            in_specs=[
                pl.BlockSpec((None, C, tT2), lambda b, t: (b, 0, t)),
                pl.BlockSpec((None, C, 1), lambda b, t: (b, 0, 0)),
                pl.BlockSpec((None, C, 1), lambda b, t: (b, 0, 0)),
                pl.BlockSpec(memory_space=pltpu.MemorySpace.SMEM),
            ],
            out_specs=pl.BlockSpec((None, C, tT2), lambda b, t: (b, 0, t)),
        ),
        compiler_params=pltpu.CompilerParams(
            dimension_semantics=("parallel", "parallel"),
            vmem_limit_bytes=vmem_limit,
        ),
    )(x, scale3, shift3, alpha1)


def norm_act_ref(x, gamma, beta, alpha):
    """Pure-JAX reference matching the PyTorch NormAct forward."""
    xf = x.astype(jnp.float32)
    mean = jnp.mean(xf, axis=(1, 2), keepdims=True)
    var = jnp.mean((xf - mean) ** 2, axis=(1, 2), keepdims=True)
    normed = (xf - mean) / jnp.sqrt(var + EPS)
    y = normed * gamma[None, :, None] + beta[None, :, None]
    return jnp.where(y >= 0, y, alpha * y).astype(x.dtype)


if __name__ == "__main__":
    key = jax.random.PRNGKey(0)

    # PyTorch init: GlobLN gamma=ones(C), beta=zeros(C); nn.PReLU() alpha=0.25
    alpha = jnp.float32(0.25)

    # 1) Fused single-pass path at a small shape (B, C, T).
    B, C, T = 2, 4, 16
    x = jax.random.normal(key, (B, C, T), dtype=jnp.float32)
    gamma = jnp.ones((C,), jnp.float32)
    beta = jnp.zeros((C,), jnp.float32)
    out = jax.block_until_ready(norm_act(x, gamma, beta, alpha))
    ref = norm_act_ref(x, gamma, beta, alpha)
    assert out.shape == (B, C, T)
    assert jnp.allclose(out, ref, atol=1e-4, rtol=1e-4), "mismatch (fused path)"

    # 2) Tiled fallback: even tile count (nSplit=2) + ragged tail.
    B2, C2, T2 = 2, 8, 200
    x2 = jax.random.normal(jax.random.PRNGKey(1), (B2, C2, T2), dtype=jnp.float32)
    g2 = 1.0 + 0.1 * jax.random.normal(jax.random.PRNGKey(2), (C2,), jnp.float32)
    b2 = 0.1 * jax.random.normal(jax.random.PRNGKey(3), (C2,), jnp.float32)
    out2 = jax.block_until_ready(norm_act(x2, g2, b2, alpha, time_tile=128))
    ref2 = norm_act_ref(x2, g2, b2, alpha)
    assert jnp.allclose(out2, ref2, atol=1e-4, rtol=1e-4), "mismatch (tiled, split)"

    # 3) Tiled fallback: odd tile count (nSplit=1), B=1, ragged tail.
    B3, C3, T3 = 1, 8, 300
    x3 = jax.random.normal(jax.random.PRNGKey(4), (B3, C3, T3), dtype=jnp.float32)
    g3 = 1.0 + 0.1 * jax.random.normal(jax.random.PRNGKey(5), (C3,), jnp.float32)
    b3 = 0.1 * jax.random.normal(jax.random.PRNGKey(6), (C3,), jnp.float32)
    out3 = jax.block_until_ready(norm_act(x3, g3, b3, alpha, time_tile=128))
    ref3 = norm_act_ref(x3, g3, b3, alpha)
    assert jnp.allclose(out3, ref3, atol=1e-4, rtol=1e-4), "mismatch (tiled, no split)"

    print("KERNEL_OK")
</pallas_src>

<mosaic_0001>
module attributes {stable_mosaic.version = 11 : i64} {
  func.func @_fused_kernel(%arg0: i32, %arg1: memref<1x4x16xf32, #tpu.memory_space<vmem>>, %arg2: memref<4x1xf32, #tpu.memory_space<vmem>>, %arg3: memref<4x1xf32, #tpu.memory_space<vmem>>, %arg4: memref<1xf32, #tpu.memory_space<smem>>, %arg5: memref<1x4x16xf32, #tpu.memory_space<vmem>>) attributes {dimension_semantics = [#tpu.dimension_semantics<parallel>], iteration_bounds = array<i64: 2>, scalar_prefetch = 0 : i64, scratch_operands = 0 : i64, tpu.core_type = #tpu.core_type<tc>, window_params = [{transform_indices = @transform_0, window_bounds = array<i64: 1, 4, 16>}, {pipeline_mode = #tpu.pipeline_mode<synchronous>, transform_indices = @transform_1, window_bounds = array<i64: 4, 1>}, {pipeline_mode = #tpu.pipeline_mode<synchronous>, transform_indices = @transform_2, window_bounds = array<i64: 4, 1>}, {transform_indices = @transform_3, window_bounds = array<i64: 1>}, {transform_indices = @transform_4, window_bounds = array<i64: 1, 4, 16>}]} {
    %c0 = arith.constant 0 : index
    %c0_0 = arith.constant 0 : index
    %c0_1 = arith.constant 0 : index
    %0 = vector.load %arg1[%c0, %c0_0, %c0_1] : memref<1x4x16xf32, #tpu.memory_space<vmem>>, vector<1x4x16xf32>
    %1 = vector.shape_cast %0 : vector<1x4x16xf32> to vector<4x16xf32>
    %2 = vector.shape_cast %1 : vector<4x16xf32> to vector<1x4x16xf32>
    %cst = arith.constant dense<0.000000e+00> : vector<1xf32>
    %3 = vector.multi_reduction <add>, %2, %cst [1, 2] : vector<1x4x16xf32> to vector<1xf32>
    %4 = vector.shape_cast %3 : vector<1xf32> to vector<1x1x1xf32>
    %5 = vector.extract %4[0, 0, 0] : f32 from vector<1x1x1xf32>
    %cst_2 = arith.constant 1.562500e-02 : f32
    %6 = arith.mulf %5, %cst_2 : f32
    %7 = vector.broadcast %6 : f32 to vector<4x16xf32>
    %8 = arith.subf %1, %7 : vector<4x16xf32>
    %9 = arith.mulf %8, %8 : vector<4x16xf32>
    %10 = vector.shape_cast %9 : vector<4x16xf32> to vector<1x4x16xf32>
    %cst_3 = arith.constant dense<0.000000e+00> : vector<1xf32>
    %11 = vector.multi_reduction <add>, %10, %cst_3 [1, 2] : vector<1x4x16xf32> to vector<1xf32>
    %12 = vector.shape_cast %11 : vector<1xf32> to vector<1x1x1xf32>
    %13 = vector.extract %12[0, 0, 0] : f32 from vector<1x1x1xf32>
    %cst_4 = arith.constant 1.562500e-02 : f32
    %14 = arith.mulf %13, %cst_4 : f32
    %cst_5 = arith.constant 9.99999993E-9 : f32
    %15 = arith.addf %14, %cst_5 : f32
    %16 = math.rsqrt %15 : f32
    %c0_6 = arith.constant 0 : index
    %c0_7 = arith.constant 0 : index
    %17 = vector.load %arg2[%c0_6, %c0_7] : memref<4x1xf32, #tpu.memory_space<vmem>>, vector<4x1xf32>
    %18 = vector.broadcast %16 : f32 to vector<4x1xf32>
    %19 = arith.mulf %17, %18 : vector<4x1xf32>
    %20 = vector.broadcast %19 : vector<4x1xf32> to vector<4x16xf32>
    %21 = arith.mulf %8, %20 : vector<4x16xf32>
    %c0_8 = arith.constant 0 : index
    %c0_9 = arith.constant 0 : index
    %22 = vector.load %arg3[%c0_8, %c0_9] : memref<4x1xf32, #tpu.memory_space<vmem>>, vector<4x1xf32>
    %23 = vector.broadcast %22 : vector<4x1xf32> to vector<4x16xf32>
    %24 = arith.addf %21, %23 : vector<4x16xf32>
    %c0_10 = arith.constant 0 : index
    %25 = memref.load %arg4[%c0_10] : memref<1xf32, #tpu.memory_space<smem>>
    %cst_11 = arith.constant 0.000000e+00 : f32
    %26 = vector.broadcast %cst_11 : f32 to vector<4x16xf32>
    %27 = arith.cmpf oge, %24, %26 : vector<4x16xf32>
    %28 = vector.broadcast %25 : f32 to vector<4x16xf32>
    %29 = arith.mulf %28, %24 : vector<4x16xf32>
    %30 = arith.select %27, %24, %29 : vector<4x16xi1>, vector<4x16xf32>
    %c0_12 = arith.constant 0 : index
    %c0_13 = arith.constant 0 : index
    %c0_14 = arith.constant 0 : index
    %31 = vector.load %arg5[%c0_12, %c0_13, %c0_14] : memref<1x4x16xf32, #tpu.memory_space<vmem>>, vector<1x4x16xf32>
    %32 = vector.shape_cast %31 : vector<1x4x16xf32> to vector<4x16xf32>
    %33 = vector.shape_cast %30 : vector<4x16xf32> to vector<1x4x16xf32>
    tpu.vector_store %arg5[%c0_12, %c0_13, %c0_14], %33 {strides = array<i32>} : memref<1x4x16xf32, #tpu.memory_space<vmem>>, vector<1x4x16xf32>,
    return
  }
  func.func @transform_0(%arg0: i32) -> (i32, i32, i32) {
    %c0_i32 = arith.constant 0 : i32
    %c0_i32_0 = arith.constant 0 : i32
    %c0_i32_1 = arith.constant 0 : i32
    return %arg0, %c0_i32, %c0_i32_0 : i32, i32, i32
  }
  func.func @transform_1(%arg0: i32) -> (i32, i32) {
    %c0_i32 = arith.constant 0 : i32
    %c0_i32_0 = arith.constant 0 : i32
    %c0_i32_1 = arith.constant 0 : i32
    return %c0_i32, %c0_i32_0 : i32, i32
  }
  func.func @transform_2(%arg0: i32) -> (i32, i32) {
    %c0_i32 = arith.constant 0 : i32
    %c0_i32_0 = arith.constant 0 : i32
    %c0_i32_1 = arith.constant 0 : i32
    return %c0_i32, %c0_i32_0 : i32, i32
  }
  func.func @transform_3(%arg0: i32) -> i32 {
    %c0_i32 = arith.constant 0 : i32
    %c0_i32_0 = arith.constant 0 : i32
    return %c0_i32 : i32
  }
  func.func @transform_4(%arg0: i32) -> (i32, i32, i32) {
    %c0_i32 = arith.constant 0 : i32
    %c0_i32_0 = arith.constant 0 : i32
    %c0_i32_1 = arith.constant 0 : i32
    return %arg0, %c0_i32, %c0_i32_0 : i32, i32, i32
  }
}

</mosaic_0001>

<llo_original>
// kernel: norm_act.1
$region0: #{norm_act.1}
  #allocation0 [shape = 'u32[]', space=smem, size = 0x4, offset = 0x4, fixed_abs, tag = 'smem constant byte address 0x4 - core index']
  #allocation1 [shape = 'u32[72,128]{1,0:T(1,128)}', space=vmem, size = 0x9000, scoped, tag = 'internal scratch']
  #allocation2 [shape = 'f32[1]{0:T(128)S(6)}', space=smem, size = 0x200, scoped, tag = 'scoped memory for norm_act.1']
  %s0 = inlined_call_operand.vmem [shape: f32[2,4,16], index: 0, kind: input, shape index: {}]
  %s1 = inlined_call_operand.vmem [shape: f32[4,1], index: 1, kind: input, shape index: {}]
  %s2 = inlined_call_operand.vmem [shape: f32[4,1], index: 2, kind: input, shape index: {}]
  %s3 = inlined_call_operand.<no memory space> [shape: f32[1], index: 3, kind: input, shape index: {}]
  %s4 = inlined_call_operand.hbm [shape: f32[2,4,16], index: 4, kind: output, shape index: {}]
  %s5 = sld [smem:[#allocation0]]
  $region49: #{norm_act.1} parent=0
    _
  %s7 = ssub.s32 1, %s5
  %s8 = scalar_select 0, %s7, %s5
  %9 = sst [smem:[#allocation2]] %s3
  $region1: #{norm_act.1} parent=0
    #allocation3 [shape = 'u8[4096]{0}', space=vmem, size = 0x1000, scoped, tag = 'output window, operand 0']
    #allocation4 [shape = 's32[2]{0}', space=sflag, size = 0x8, scoped, tag = 'scoped memory for norm_act.1']
    %10 = vsyncpa [#allocation4], 0
    %s11 = scalar_lea.sflag [#allocation4], 1
    %12 = vsyncpa %s11, 0
    loop: start=0, step=1, limit=4
    $region2: #{norm_act.1} parent=1 // loop_pre_header
      _
    $region3: #{norm_act.1} parent=1 // loop_header
      %s14 = sphi 0, %s18
      %p15 = scmp.ge.s32.totalorder %s14, 4
      %s24 = sphi 0, %s26
      %s27 = sphi 0, %s24
      %s28 = sphi 0, %s27
      %s44 = sphi 0, %s28
      %s48 = sphi 0, %s48
      %s50 = sphi 0, %s48
      %s51 = sphi 0, %s50
      %s65 = sphi 0, %s51
      %s69 = sphi 0, %s69
      %s71 = sphi 0, %s69
      %s72 = sphi 0, %s71
      %s86 = sphi 0, %s72
      %s90 = sphi 0, %s90
      %s92 = sphi 0, %s90
      %s93 = sphi 0, %s92
      %s107 = sphi 0, %s93
      %s113 = sphi 0, %s115
      %s116 = sphi 0, %s113
      %s117 = sphi 0, %s116
      %s133 = sphi 0, %s117
    $region4: #{norm_act.1} parent=1 // loop_header_branch
      %17 = sbr.rel (%p15) target = $region8
    $region5: #{norm_act.1} parent=1 // loop_body
      %s19 = ssub.s32 %s14, 1
      %s20 = ssub.s32 %s14, 2
      %s21 = sadd.s32 %s14, 1
      %s22 = ssub.s32 %s14, %s21
      %p23 = scmp.eq.s32.totalorder %s22, 0
      %s25 = sadd.s32 %s24, 1
      %s26 = scalar_select %p23, %s24, %s25
      %p29 = pneg %p23
      %p30 = scmp.eq.s32.totalorder %s14, 1
      %p31 = por %p29, %p30
      %p32 = scmp.ne.s32.totalorder %s24, %s27
      %p33 = scmp.eq.s32.totalorder %s14, 0
      %p34 = por %p32, %p33
      %p35 = scmp.ne.s32.totalorder %s24, %s27
      %p36 = scmp.eq.s32.totalorder %s19, 1
      %p37 = por %p35, %p36
      %p38 = scmp.ne.s32.totalorder %s27, %s28
      %p39 = scmp.eq.s32.totalorder %s19, 0
      %p40 = por %p38, %p39
      %p41 = scmp.ne.s32.totalorder %s27, %s28
      %p42 = scmp.eq.s32.totalorder %s20, 1
      %p43 = por %p41, %p42
      %p45 = scmp.ne.s32.totalorder %s28, %s44
      %p46 = scmp.eq.s32.totalorder %s20, 0
      %p47 = por %p45, %p46
      %s49 = sadd.s32 %s48, 1
      %p52 = scmp.eq.s32.totalorder %s14, 1
      %p53 = scmp.ne.s32.totalorder %s48, %s50
      %p54 = scmp.eq.s32.totalorder %s14, 0
      %p55 = por %p53, %p54
      %p56 = scmp.ne.s32.totalorder %s48, %s50
      %p57 = scmp.eq.s32.totalorder %s19, 1
      %p58 = por %p56, %p57
      %p59 = scmp.ne.s32.totalorder %s50, %s51
      %p60 = scmp.eq.s32.totalorder %s19, 0
      %p61 = por %p59, %p60
      %p62 = scmp.ne.s32.totalorder %s50, %s51
      %p63 = scmp.eq.s32.totalorder %s20, 1
      %p64 = por %p62, %p63
      %p66 = scmp.ne.s32.totalorder %s51, %s65
      %p67 = scmp.eq.s32.totalorder %s20, 0
      %p68 = por %p66, %p67
      %s70 = sadd.s32 %s69, 1
      %p73 = scmp.eq.s32.totalorder %s14, 1
      %p74 = scmp.ne.s32.totalorder %s69, %s71
      %p75 = scmp.eq.s32.totalorder %s14, 0
      %p76 = por %p74, %p75
      %p77 = scmp.ne.s32.totalorder %s69, %s71
      %p78 = scmp.eq.s32.totalorder %s19, 1
      %p79 = por %p77, %p78
      %p80 = scmp.ne.s32.totalorder %s71, %s72
      %p81 = scmp.eq.s32.totalorder %s19, 0
      %p82 = por %p80, %p81
      %p83 = scmp.ne.s32.totalorder %s71, %s72
      %p84 = scmp.eq.s32.totalorder %s20, 1
      %p85 = por %p83, %p84
      %p87 = scmp.ne.s32.totalorder %s72, %s86
      %p88 = scmp.eq.s32.totalorder %s20, 0
      %p89 = por %p87, %p88
      %s91 = sadd.s32 %s90, 1
      %p94 = scmp.eq.s32.totalorder %s14, 1
      %p95 = scmp.ne.s32.totalorder %s90, %s92
      %p96 = scmp.eq.s32.totalorder %s14, 0
      %p97 = por %p95, %p96
      %p98 = scmp.ne.s32.totalorder %s90, %s92
      %p99 = scmp.eq.s32.totalorder %s19, 1
      %p100 = por %p98, %p99
      %p101 = scmp.ne.s32.totalorder %s92, %s93
      %p102 = scmp.eq.s32.totalorder %s19, 0
      %p103 = por %p101, %p102
      %p104 = scmp.ne.s32.totalorder %s92, %s93
      %p105 = scmp.eq.s32.totalorder %s20, 1
      %p106 = por %p104, %p105
      %p108 = scmp.ne.s32.totalorder %s93, %s107
      %p109 = scmp.eq.s32.totalorder %s20, 0
      %p110 = por %p108, %p109
      %s111 = ssub.s32 %s14, %s21
      %p112 = scmp.eq.s32.totalorder %s111, 0
      %s114 = sadd.s32 %s113, 1
      %s115 = scalar_select %p112, %s113, %s114
      %p118 = pneg %p112
      %p119 = scmp.eq.s32.totalorder %s14, 1
      %p120 = por %p118, %p119
      %p121 = scmp.ne.s32.totalorder %s113, %s116
      %p122 = scmp.eq.s32.totalorder %s14, 0
      %p123 = por %p121, %p122
      %p124 = scmp.ne.s32.totalorder %s113, %s116
      %p125 = scmp.eq.s32.totalorder %s19, 1
      %p126 = por %p124, %p125
      %p127 = scmp.ne.s32.totalorder %s116, %s117
      %p128 = scmp.eq.s32.totalorder %s19, 0
      %p129 = por %p127, %p128
      %p130 = scmp.ne.s32.totalorder %s116, %s117
      %p131 = scmp.eq.s32.totalorder %s20, 1
      %p132 = por %p130, %p131
      %p134 = scmp.ne.s32.totalorder %s117, %s133
      %p135 = scmp.eq.s32.totalorder %s20, 0
      %p136 = por %p134, %p135
      %p137 = scmp.le.s32.totalorder 1, %s14
      %p138 = scmp.lt.s32.totalorder %s14, 3
      %p139 = pnand %p137, %p138
      %p140 = pneg %p139
      // Predicated region
      $region9: #{norm_act.1} parent=5 // pred_check
        _
      $region10: #{norm_act.1} parent=5 // pred_check_branch
        %142 = sbr.rel (%p139) target = $region12
      $region11: #{norm_act.1} parent=5 // pred_region
        %s143 = ssub.s32 %s14, 1
        // Predicated region
        $region13: #{norm_act.1} parent=11 // pred_check
          %p144 = pneg %p61
        $region14: #{norm_act.1} parent=11 // pred_check_branch
          %146 = sbr.rel (%p144) target = $region16
        $region15: #{norm_act.1} parent=11 // pred_region
          _
        $region16: #{norm_act.1} parent=11 // pred_fallthru
          _
        // Predicated region
        $region17: #{norm_act.1} parent=11 // pred_check
          %p147 = pneg %p82
        $region18: #{norm_act.1} parent=11 // pred_check_branch
          %149 = sbr.rel (%p147) target = $region20
        $region19: #{norm_act.1} parent=11 // pred_region
          _
        $region20: #{norm_act.1} parent=11 // pred_fallthru
          _
        // Predicated region
        $region21: #{norm_act.1} parent=11 // pred_check
          %p150 = pneg %p103
        $region22: #{norm_act.1} parent=11 // pred_check_branch
          %152 = sbr.rel (%p150) target = $region24
        $region23: #{norm_act.1} parent=11 // pred_region
          _
        $region24: #{norm_act.1} parent=11 // pred_fallthru
          _
      $region12: #{norm_act.1} parent=5 // pred_fallthru
        _
      %p153 = scmp.lt.s32.totalorder %s14, 2
      // Predicated region
      $region25: #{norm_act.1} parent=5 // pred_check
        %p154 = pneg %p153
      $region26: #{norm_act.1} parent=5 // pred_check_branch
        %156 = sbr.rel (%p154) target = $region28
      $region27: #{norm_act.1} parent=5 // pred_region
        // Predicated region
        $region29: #{norm_act.1} parent=27 // pred_check
          %p157 = pneg %p34
        $region30: #{norm_act.1} parent=27 // pred_check_branch
          %159 = sbr.rel (%p157) target = $region32
        $region31: #{norm_act.1} parent=27 // pred_region
          %p160 = scmp.lt.s32.totalorder %s14, 1
          %s161 = scalar_select %p160, %s14, 1
          %s162 = smul.addr %s161, 4
          %s163 = scalar_lea.vmem %s0, %s162
        $region32: #{norm_act.1} parent=27 // pred_fallthru
          _
      $region28: #{norm_act.1} parent=5 // pred_fallthru
        _
      %p164 = scmp.le.s32.totalorder 1, %s14
      %p165 = scmp.lt.s32.totalorder %s14, 3
      %p166 = pnand %p164, %p165
      %p167 = pneg %p166
      // Predicated region
      $region33: #{norm_act.1} parent=5 // pred_check
        _
      $region34: #{norm_act.1} parent=5 // pred_check_branch
        %169 = sbr.rel (%p166) target = $region36
      $region35: #{norm_act.1} parent=5 // pred_region
        %s170 = ssub.s32 %s14, 1
        %p171 = scmp.lt.s32.totalorder %s19, 1
        %s172 = scalar_select %p171, %s19, 1
        %s173 = smul.addr %s172, 4
        %s174 = scalar_lea.vmem %s0, %s173
        %p175 = pneg %p40
        %p176 = pneg %p37
        %p177 = pneg %p61
        %p178 = pneg %p58
        %p179 = pneg %p82
        %p180 = pneg %p79
        %p181 = pneg %p103
        %p182 = pneg %p100
        %p183 = pneg %p129
        %p184 = pneg %p126
        %s185 = sand.u32 %s116, 1
        %s186 = scalar_lea.sflag [#allocation4], %s185
        %s187 = sand.u32 %s116, 1
        %s188 = smul.addr %s187, 4
        %s189 = scalar_lea.vmem [#allocation3], %s188
        %p190 = scmp.lt.s32.totalorder %s19, 1
        %s191 = scalar_select %p190, %s19, 1
        %s192 = smul.addr %s191, 4
        %s193 = scalar_lea.vmem %s0, %s192
        %v194 = vld [vmem:[%s193] sm:$0xf]
        %vm195 = vcmask 125952
        %v196 = vsel %vm195, %v194, 0.0
        %197 = vadd.xlane.f32.xlu0 %v196
        %v198 = vpop.xlane.xlu0 %197
        %v199 = vrot.slane %v198, 4
        %v200 = vadd.f32 %v198, %v199
        %v201 = vrot.slane %v200, 2
        %v202 = vadd.f32 %v200, %v201
        %v203 = vrot.slane %v202, 1
        %v204 = vadd.f32 %v202, %v203
        %s205 = vtos %v204
        %s206 = smul.f32 %s205, 0.015625
        %v207 = vstv %s206
        %v208 = vsub.f32 %v194, %v207
        %v209 = vmul.f32 %v208, %v208
        %v210 = vsel %vm195, %v209, 0.0
        %211 = vadd.xlane.f32.xlu0 %v210
        %v212 = vpop.xlane.xlu0 %211
        %v213 = vrot.slane %v212, 4
        %v214 = vadd.f32 %v212, %v213
        %v215 = vrot.slane %v214, 2
        %v216 = vadd.f32 %v214, %v215
        %v217 = vrot.slane %v216, 1
        %v218 = vadd.f32 %v216, %v217
        %s219 = vtos %v218
        %s220 = smul.f32 %s219, 0.015625
        %s221 = sadd.f32 %s220, 1e-08
        %v222 = vstv %s221
        %v223 = vrsqrt.pop %v222
        %v224 = vmul.f32 %v223, %v222
        %v225 = vmul.f32 %v224, %v223
        %v226 = vmul.f32 0.5, %v225
        %v227 = vsub.f32 1.5, %v226
        %v228 = vmul.f32 %v223, %v227
        %vm229 = vweird.f32 %v222
        %vm230 = vweird.f32 %v223
        %vm231 = vmor %vm229, %vm230
        %v232 = vsel %vm231, %v223, %v228
        %s233 = vtos %v232
        %v234 = vld [vmem:[%s1] sm:$0xf]
        %v235 = vstv %s233
        %v236 = vmul.f32 %v234, %v235
        %238 = vset.pattern.permute.xlu0 0
        %239 = vperm.xlu0 %238, %v236
        %v240 = vpop.permute.xlu0 %239
        %v242 = vmul.f32 %v208, %v240
        %v243 = vld [vmem:[%s2] sm:$0xf]
        %245 = vset.pattern.permute.xlu0 0
        %246 = vperm.xlu0 %245, %v243
        %v247 = vpop.permute.xlu0 %246
        %v249 = vadd.f32 %v242, %v247
        %s250 = sld [smem:[#allocation2]]
        %vm251 = vcmp.ge.f32.partialorder %v249, 0.0
        %v252 = vstv %s250
        %v253 = vmul.f32 %v252, %v249
        %v254 = vsel %vm251, %v249, %v253
        %255 = vst.msk [vmem:[%s189] sm:$0xf] %vm195, %v254
        %s256 = sand.u32 %s116, 1
        %s257 = scalar_lea.sflag [#allocation4], %s256
        %s258 = sand.u32 %s116, 1
        %s259 = smul.addr %s258, 4
        %s260 = scalar_lea.vmem [#allocation3], %s259
        // Predicated region
        $region37: #{norm_act.1} parent=35 // pred_check
          %p261 = pneg %p126
        $region38: #{norm_act.1} parent=35 // pred_check_branch
          %263 = sbr.rel (%p261) target = $region40
        $region39: #{norm_act.1} parent=35 // pred_region
          %265 = vsyncadd %s257, 0
          %s266 = smul.addr %s19, 4
          %s267 = scalar_lea.hbm %s4, %s266
          %s269 = sshll.u32 %s260, 4
          %s270 = int_to_ptr.vmem [resolvable:$true] %s269
          %s271 = sshll.u32 %s267, 4
          %s272 = int_to_ptr.hbm [resolvable:$true] %s271
          %274 = dma.vmem_to_hbm [thread:$0]  %s270, 64, %s272, %s257
        $region40: #{norm_act.1} parent=35 // pred_fallthru
          _
      $region36: #{norm_act.1} parent=5 // pred_fallthru
        _
      %p275 = scmp.le.s32.totalorder 2, %s14
      // Predicated region
      $region41: #{norm_act.1} parent=5 // pred_check
        %p276 = pneg %p275
      $region42: #{norm_act.1} parent=5 // pred_check_branch
        %278 = sbr.rel (%p276) target = $region44
      $region43: #{norm_act.1} parent=5 // pred_region
        %s279 = ssub.s32 %s14, 2
        // Predicated region
        $region45: #{norm_act.1} parent=43 // pred_check
          %p280 = pneg %p132
        $region46: #{norm_act.1} parent=43 // pred_check_branch
          %282 = sbr.rel (%p280) target = $region48
        $region47: #{norm_act.1} parent=43 // pred_region
          %s283 = sand.u32 %s117, 1
          %s284 = scalar_lea.sflag [#allocation4], %s283
          %s285 = sand.u32 %s117, 1
          %s286 = smul.addr %s285, 4
          %s287 = scalar_lea.vmem [#allocation3], %s286
          %289 = dma.done %s284, 64
        $region48: #{norm_act.1} parent=43 // pred_fallthru
          _
      $region44: #{norm_act.1} parent=5 // pred_fallthru
        _
    $region6: #{norm_act.1} parent=1 // loop_footer
      %s18 = sadd.s32 1, %s14
    $region7: #{norm_act.1} parent=1 // loop_footer_branch
      %13 = sbr.rel target = $region3
    $region8: #{norm_act.1} parent=1 // loop_exit
      _
    %290 = vsyncpa [#allocation4], 1
    %s291 = scalar_lea.sflag [#allocation4], 1
    %292 = vsyncpa %s291, 1

</llo_original>
